<compile_context>
chip_gen: v6e
topology: v6e:2x2x1
jax: 0.10.0
libtpu: 0.0.40
codegen_flags: <defaults>
</compile_context>

<pallas_src>
import jax
import jax.numpy as jnp
from jax.experimental import pallas as pl
from jax.experimental.pallas import tpu as pltpu


def _round_up(n, m):
    return ((n + m - 1) // m) * m


def _itemsize(dt):
    return jnp.dtype(dt).itemsize


# ----------------------------- kernels --------------------------------------

def _linear_kernel(x_ref, wt_ref, b_ref, o_ref):
    """y = x @ W^T + b with the contraction dim D fully resident in the blocks.

    x_ref : (TB, D)   input batch tile
    wt_ref: (D, TN)   pre-transposed weight tile (feeds MXU directly, no vxpose)
    b_ref : (1, TN)   f32 bias row (broadcast add on the VPU)
    o_ref : (TB, TN)  output tile
    """
    y = jnp.dot(x_ref[...], wt_ref[...], preferred_element_type=jnp.float32)
    o_ref[...] = (y + b_ref[...].astype(jnp.float32)).astype(o_ref.dtype)


def _linear_kernel_dred(x_ref, wt_ref, b_ref, o_ref, acc_ref):
    """Same op with D tiled along the last ("arbitrary") grid axis; f32 accumulator."""
    @pl.when(pl.program_id(2) == 0)
    def _():
        acc_ref[...] = jnp.zeros_like(acc_ref)

    acc_ref[...] += jnp.dot(x_ref[...], wt_ref[...],
                            preferred_element_type=jnp.float32)

    @pl.when(pl.program_id(2) == pl.num_programs(2) - 1)
    def _():
        o_ref[...] = (acc_ref[...] + b_ref[...].astype(jnp.float32)).astype(o_ref.dtype)


# ----------------------------- wrapper ---------------------------------------

_VMEM_TILE_BUDGET = 28 * 1024 * 1024   # per-step working-set target (v7x-safe)
_VMEM_LIMIT_BYTES = 48 * 1024 * 1024   # > v5e/v6e scoped defaults, < v7x 64 MiB physical
_MAX_BATCH_TILE = 1024                 # ~86% of HBM roofline measured at 1024-row tiles
_MAX_N_TILE = 512                      # lane-dense output-feature tile for wide K
_MAX_D_TILE = 2048                     # contraction tile when D is large & divisible


def prepare_linear_params(w, b, *, compute_dtype=jnp.float32):
    """Hoisted once-per-weight layout work: PyTorch [K, D] -> MXU-friendly [D, K]."""
    K, D = w.shape
    wt = jnp.asarray(w, dtype=compute_dtype).T            # (D, K)
    bp = jnp.asarray(b, dtype=jnp.float32).reshape(1, K)  # f32 bias row
    return wt, bp


def modele_lineaire_forward(x, wt, bp, *, compute_dtype=None):
    """Pallas forward of nn.Linear: y = x @ W.T + b.

    x : (B, D)  activations
    wt: (D, K)  pre-transposed weight (from prepare_linear_params)
    bp: (1, K)  f32 bias row        (from prepare_linear_params)
    """
    B, D = x.shape
    Dw, K = wt.shape
    assert D == Dw, "x / weight contraction dims disagree"
    if compute_dtype is None:
        compute_dtype = wt.dtype
    out_dtype = x.dtype
    x = x.astype(compute_dtype)    # no-op when dtypes already match
    wt = wt.astype(compute_dtype)

    # ---- tile selection ------------------------------------------------------
    # Output-feature (N) tile: full K when narrow (no lane padding, no post-call
    # slice); lane-dense multiple of 128 otherwise (ragged tail masked by Pallas).
    if K <= 128:
        tn = K
    else:
        tn = min(_MAX_N_TILE, _round_up(K, 128))
    grid_n = pl.cdiv(K, tn)

    # Contraction (D) tile: only tile when D is large AND evenly divisible — a
    # ragged reduction block would feed garbage into valid output rows.
    # TODO(synk): for huge D with no 128-multiple divisor, pad W^T rows once at
    # prepare time instead of keeping D resident.
    td = D
    if D > _MAX_D_TILE:
        for cand in (_MAX_D_TILE, 1024, 512, 256, 128):
            if D % cand == 0:
                td = cand
                break
    grid_d = pl.cdiv(D, td)

    xb = _itemsize(compute_dtype)
    ob = _itemsize(out_dtype)
    w_block_bytes = td * tn * xb
    # Single-buffer the weight block when it is grid-invariant and big enough to
    # matter (double-buffering a constant block just doubles its VMEM footprint).
    weight_resident = (grid_n == 1 and grid_d == 1)
    w_buffers = 1 if (weight_resident and w_block_bytes >= (1 << 20)) else 2

    # Batch tile from the VMEM budget: x dbl-buf + out dbl-buf + f32 accumulator.
    bytes_per_row = 2 * td * xb + 2 * tn * ob + tn * 4
    avail = _VMEM_TILE_BUDGET - w_buffers * w_block_bytes - 2 * tn * 4
    rows_cap = max(8, avail // bytes_per_row)
    tile_cap = min(_MAX_BATCH_TILE, rows_cap)
    if B > 128:
        # v7x megacore: keep >= 2 equal batch tiles so ("parallel", ...) actually
        # shards across both TensorCores.  Harmless on single-TC v5e/v6e.
        tile_cap = min(tile_cap, _round_up(pl.cdiv(B, 2), 8))
    if tile_cap >= B:
        tb = B                                   # single full-extent batch block
    else:
        tb = max(8, (tile_cap // 8) * 8)         # partial tail block masked by Pallas
    grid_b = pl.cdiv(B, tb)

    # ---- pallas_call ---------------------------------------------------------
    cost = pl.CostEstimate(
        flops=2 * B * D * K,
        transcendentals=0,
        bytes_accessed=B * D * xb + D * K * xb + K * 4 + B * K * ob,
    )

    if grid_d == 1:
        w_spec_kwargs = dict(pipeline_mode=pl.Buffered(1)) if w_buffers == 1 else {}
        grid_spec = pltpu.PrefetchScalarGridSpec(
            num_scalar_prefetch=0,
            grid=(grid_b, grid_n),
            in_specs=[
                pl.BlockSpec((tb, D), lambda i, j: (i, 0)),            # x tile
                pl.BlockSpec((D, tn), lambda i, j: (0, j), **w_spec_kwargs),  # W^T
                pl.BlockSpec((1, tn), lambda i, j: (0, j)),            # bias
            ],
            out_specs=pl.BlockSpec((tb, tn), lambda i, j: (i, j)),
        )
        kernel = _linear_kernel
        dim_sem = ("parallel", "parallel")
    else:
        grid_spec = pltpu.PrefetchScalarGridSpec(
            num_scalar_prefetch=0,
            grid=(grid_b, grid_n, grid_d),
            in_specs=[
                pl.BlockSpec((tb, td), lambda i, j, k: (i, k)),        # x tile
                pl.BlockSpec((td, tn), lambda i, j, k: (k, j)),        # W^T tile
                pl.BlockSpec((1, tn), lambda i, j, k: (0, j)),         # bias
            ],
            out_specs=pl.BlockSpec((tb, tn), lambda i, j, k: (i, j)),
            scratch_shapes=[pltpu.VMEM((tb, tn), jnp.float32)],
        )
        kernel = _linear_kernel_dred
        dim_sem = ("parallel", "parallel", "arbitrary")

    return pl.pallas_call(
        kernel,
        out_shape=jax.ShapeDtypeStruct((B, K), out_dtype),
        grid_spec=grid_spec,
        compiler_params=pltpu.CompilerParams(
            dimension_semantics=dim_sem,
            vmem_limit_bytes=_VMEM_LIMIT_BYTES,
        ),
        cost_estimate=cost,
    )(x, wt, bp)


def reference_forward(x, w, b):
    """Plain-JAX reference of the PyTorch forward for correctness checking."""
    return x @ w.T + b


if __name__ == "__main__":
    # Small shapes consistent with ModeleLineaire(d, k): batch=16, d=32, k=8.
    B, D, K = 16, 32, 8

    key = jax.random.PRNGKey(0)
    kx, kw, kb = jax.random.split(key, 3)

    x = jax.random.normal(kx, (B, D), dtype=jnp.float32)
    w = jax.random.normal(kw, (K, D), dtype=jnp.float32) * 0.1
    b = jax.random.normal(kb, (K,), dtype=jnp.float32) * 0.1

    # Weight layout work is hoisted: done once when params are created.
    wt, bp = prepare_linear_params(w, b)

    out = modele_lineaire_forward(x, wt, bp)
    out = jax.block_until_ready(out)

    ref = reference_forward(x, w, b)
    assert out.shape == (B, K)
    assert jnp.allclose(out, ref, atol=1e-4, rtol=1e-4), "mismatch vs reference"

    print("KERNEL_OK")
</pallas_src>

<mosaic_0001>
module attributes {stable_mosaic.version = 11 : i64} {
  func.func @_linear_kernel(%arg0: i32, %arg1: i32, %arg2: memref<16x32xf32, #tpu.memory_space<vmem>>, %arg3: memref<32x8xf32, #tpu.memory_space<vmem>>, %arg4: memref<1x8xf32, #tpu.memory_space<vmem>>, %arg5: memref<16x8xf32, #tpu.memory_space<vmem>>) attributes {dimension_semantics = [#tpu.dimension_semantics<parallel>, #tpu.dimension_semantics<parallel>], iteration_bounds = array<i64: 1, 1>, scalar_prefetch = 0 : i64, scratch_operands = 0 : i64, tpu.core_type = #tpu.core_type<tc>, window_params = [{transform_indices = @transform_0, window_bounds = array<i64: 16, 32>}, {transform_indices = @transform_1, window_bounds = array<i64: 32, 8>}, {transform_indices = @transform_2, window_bounds = array<i64: 1, 8>}, {transform_indices = @transform_3, window_bounds = array<i64: 16, 8>}]} {
    %c0 = arith.constant 0 : index
    %c0_0 = arith.constant 0 : index
    %0 = vector.load %arg2[%c0, %c0_0] : memref<16x32xf32, #tpu.memory_space<vmem>>, vector<16x32xf32>
    %c0_1 = arith.constant 0 : index
    %c0_2 = arith.constant 0 : index
    %1 = vector.load %arg3[%c0_1, %c0_2] : memref<32x8xf32, #tpu.memory_space<vmem>>, vector<32x8xf32>
    %cst = arith.constant dense<0.000000e+00> : vector<16x8xf32>
    %2 = tpu.matmul %0, %1, %cst {dimension_numbers = #tpu.dot_dimension_numbers<[1], [0], [0], [1], [0, 0, 1, 1], [], []>} : vector<16x32xf32>, vector<32x8xf32>, vector<16x8xf32> -> vector<16x8xf32>
    %c0_3 = arith.constant 0 : index
    %c0_4 = arith.constant 0 : index
    %3 = vector.load %arg4[%c0_3, %c0_4] : memref<1x8xf32, #tpu.memory_space<vmem>>, vector<1x8xf32>
    %4 = vector.broadcast %3 : vector<1x8xf32> to vector<16x8xf32>
    %5 = arith.addf %2, %4 : vector<16x8xf32>
    %c0_5 = arith.constant 0 : index
    %c0_6 = arith.constant 0 : index
    %6 = vector.load %arg5[%c0_5, %c0_6] : memref<16x8xf32, #tpu.memory_space<vmem>>, vector<16x8xf32>
    tpu.vector_store %arg5[%c0_5, %c0_6], %5 {strides = array<i32>} : memref<16x8xf32, #tpu.memory_space<vmem>>, vector<16x8xf32>,
    return
  }
  func.func @transform_0(%arg0: i32, %arg1: i32) -> (i32, i32) {
    %c0_i32 = arith.constant 0 : i32
    %c0_i32_0 = arith.constant 0 : i32
    return %arg0, %c0_i32 : i32, i32
  }
  func.func @transform_1(%arg0: i32, %arg1: i32) -> (i32, i32) {
    %c0_i32 = arith.constant 0 : i32
    %c0_i32_0 = arith.constant 0 : i32
    return %c0_i32, %arg1 : i32, i32
  }
  func.func @transform_2(%arg0: i32, %arg1: i32) -> (i32, i32) {
    %c0_i32 = arith.constant 0 : i32
    %c0_i32_0 = arith.constant 0 : i32
    return %c0_i32, %arg1 : i32, i32
  }
  func.func @transform_3(%arg0: i32, %arg1: i32) -> (i32, i32) {
    %c0_i32 = arith.constant 0 : i32
    return %arg0, %arg1 : i32, i32
  }
}

</mosaic_0001>

<llo_original>
// kernel: tpu_custom_call.1
$region0: #{tpu_custom_call.1}
  #allocation0 [shape = 'u32[]', space=smem, size = 0x4, offset = 0x4, fixed_abs, tag = 'smem constant byte address 0x4 - core index']
  #allocation1 [shape = 'u32[144,128]{1,0:T(1,128)}', space=vmem, size = 0x12000, scoped, tag = 'internal scratch']
  %s0 = inlined_call_operand.vmem [shape: f32[16,32], index: 0, kind: input, shape index: {}]
  %s1 = inlined_call_operand.vmem [shape: f32[32,8], index: 1, kind: input, shape index: {}]
  %s2 = inlined_call_operand.vmem [shape: f32[1,8], index: 2, kind: input, shape index: {}]
  %s3 = inlined_call_operand.vmem [shape: f32[16,8], index: 3, kind: output, shape index: {}]
  %s4 = sld [smem:[#allocation0]]
  $region22: #{tpu_custom_call.1} parent=0
    _
  %s6 = ssub.s32 1, %s4
  %s7 = scalar_select 0, %s6, %s4
  // Predicated region
  $region2: #{tpu_custom_call.1} parent=0 // pred_check
    _
  $region3: #{tpu_custom_call.1} parent=0 // pred_check_branch
    %9 = sbr.rel (0) target = $region5
  $region4: #{tpu_custom_call.1} parent=0 // pred_region
    _
  $region5: #{tpu_custom_call.1} parent=0 // pred_fallthru
    _
  // Predicated region
  $region6: #{tpu_custom_call.1} parent=0 // pred_check
    _
  $region7: #{tpu_custom_call.1} parent=0 // pred_check_branch
    %11 = sbr.rel (0) target = $region9
  $region8: #{tpu_custom_call.1} parent=0 // pred_region
    _
  $region9: #{tpu_custom_call.1} parent=0 // pred_fallthru
    _
  // Predicated region
  $region10: #{tpu_custom_call.1} parent=0 // pred_check
    _
  $region11: #{tpu_custom_call.1} parent=0 // pred_check_branch
    %13 = sbr.rel (0) target = $region13
  $region12: #{tpu_custom_call.1} parent=0 // pred_region
    _
  $region13: #{tpu_custom_call.1} parent=0 // pred_fallthru
    _
  %v14 = vld [vmem:[%s0] sm:$0xff]
  %v15 = vld [vmem:[%s0 + $0x8] sm:$0xff]
  %v16 = vld [vmem:[%s1] sm:$0xff]
  %v17 = vld [vmem:[%s1 + $0x8] sm:$0xff]
  %v18 = vld [vmem:[%s1 + $0x10] sm:$0xff]
  %v19 = vld [vmem:[%s1 + $0x18] sm:$0xff]
  %v20 = vld [vmem:[%s2] sm:$0x1]
  %v22 = vlaneseq
  %v23 = vshrl.u32 %v22, 7
  %v24 = vsub.s32 0, %v23
  %v25 = vrot.slane %v20, %v24
  %vm27 = vcmask 261120
  %v29 = vsel %vm27, %v14, 0
  %v32 = vsel %vm27, %v15, 0
  %34 = vmatprep.subr.mxu0 0.0
  %35 = vmatpush1.msra.mxu0 0.0
  %36 = vmatprep.subr.mxu0 0.0
  %37 = vmatpush1.msra.mxu0 0.0
  %38 = vmatprep.subr.mxu0 0.0
  %39 = vmatpush1.msra.mxu0 0.0
  %40 = vmatprep.subr.mxu0 0.0
  %41 = vmatpush1.msra.mxu0 0.0
  %42 = vmatprep.subr.mxu0 0.0
  %43 = vmatpush1.msra.mxu0 0.0
  %44 = vmatprep.subr.mxu0 0.0
  %45 = vmatpush1.msra.mxu0 0.0
  %46 = vmatprep.subr.mxu0 0.0
  %47 = vmatpush1.msra.mxu0 0.0
  %48 = vmatprep.subr.mxu0 0.0
  %49 = vmatpush1.msra.mxu0 0.0
  %50 = vmatprep.subr.mxu0 0.0
  %51 = vmatpush1.msra.mxu0 0.0
  %52 = vmatprep.subr.mxu0 0.0
  %53 = vmatpush1.msra.mxu0 0.0
  %54 = vmatprep.subr.mxu0 0.0
  %55 = vmatpush1.msra.mxu0 0.0
  %56 = vmatprep.subr.mxu0 0.0
  %57 = vmatpush1.msra.mxu0 0.0
  %58 = vmatprep.subr.mxu0 0.0
  %59 = vmatpush1.msra.mxu0 %v19
  %60 = vmatprep.subr.mxu0 0.0
  %61 = vmatpush1.msra.mxu0 %v18
  %62 = vmatprep.subr.mxu0 0.0
  %63 = vmatpush1.msra.mxu0 %v17
  %64 = vmatprep.subr.mxu0 0.0
  %65 = vmatpush1.msra.mxu0 %v16
  %66 = vmatprep.subr.mxu0 0.0
  %67 = vmatpush2.msra.mxu0 0.0
  %68 = vmatprep.subr.mxu0 0.0
  %69 = vmatpush2.msra.mxu0 0.0
  %70 = vmatprep.subr.mxu0 0.0
  %71 = vmatpush2.msra.mxu0 0.0
  %72 = vmatprep.subr.mxu0 0.0
  %73 = vmatpush2.msra.mxu0 0.0
  %74 = vmatprep.subr.mxu0 0.0
  %75 = vmatpush2.msra.mxu0 0.0
  %76 = vmatprep.subr.mxu0 0.0
  %77 = vmatpush2.msra.mxu0 0.0
  %78 = vmatprep.subr.mxu0 0.0
  %79 = vmatpush2.msra.mxu0 0.0
  %80 = vmatprep.subr.mxu0 0.0
  %81 = vmatpush2.msra.mxu0 0.0
  %82 = vmatprep.subr.mxu0 0.0
  %83 = vmatpush2.msra.mxu0 0.0
  %84 = vmatprep.subr.mxu0 0.0
  %85 = vmatpush2.msra.mxu0 0.0
  %86 = vmatprep.subr.mxu0 0.0
  %87 = vmatpush2.msra.mxu0 0.0
  %88 = vmatprep.subr.mxu0 0.0
  %89 = vmatpush2.msra.mxu0 0.0
  %90 = vmatprep.subr.mxu0 0.0
  %91 = vmatpush2.msra.mxu0 0.0
  %92 = vmatprep.subr.mxu0 0.0
  %93 = vmatpush2.msra.mxu0 0.0
  %94 = vmatprep.subr.mxu0 0.0
  %95 = vmatpush2.msra.mxu0 0.0
  %96 = vmatprep.subr.mxu0 0.0
  %97 = vmatpush2.msra.mxu0 0.0
  %98 = vmatprep.mubr.f32.mxu0 0.0
  %99 = vmatmul.mubr.f32.gmra.mxu0 %v29
  %v100 = vpop.f32.mrf.mxu0
  %v101 = vadd.f32 %v25, %v100
  %v102 = vpop.f32.mrf.mxu0
  %103 = vmatprep.mubr.f32.mxu0 0.0
  %104 = vmatmul.mubr.f32.gmra.mxu0 %v32
  %v105 = vpop.f32.mrf.mxu0
  %v106 = vadd.f32 %v25, %v105
  %v107 = vpop.f32.mrf.mxu0
  %108 = vdwg.mxu0
  %vm109 = vcmask 64512
  %110 = vst.msk [vmem:[%s3] sm:$0xff] %vm109, %v101
  %111 = vst.msk [vmem:[%s3 + $0x8] sm:$0xff] %vm109, %v106
  // Predicated region
  $region14: #{tpu_custom_call.1} parent=0 // pred_check
    _
  $region15: #{tpu_custom_call.1} parent=0 // pred_check_branch
    %113 = sbr.rel (0) target = $region17
  $region16: #{tpu_custom_call.1} parent=0 // pred_region
    _
  $region17: #{tpu_custom_call.1} parent=0 // pred_fallthru
    _
  // Predicated region
  $region18: #{tpu_custom_call.1} parent=0 // pred_check
    _
  $region19: #{tpu_custom_call.1} parent=0 // pred_check_branch
    %115 = sbr.rel (0) target = $region21
  $region20: #{tpu_custom_call.1} parent=0 // pred_region
    _
  $region21: #{tpu_custom_call.1} parent=0 // pred_fallthru
    _

</llo_original>
